<compile_context>
chip_gen: v6e
topology: v6e:2x2x1
jax: 0.10.0
libtpu: 0.0.40
codegen_flags: <defaults>
</compile_context>

<pallas_src>
import functools

import jax
import jax.numpy as jnp
from jax.experimental import pallas as pl
from jax.experimental.pallas import tpu as pltpu


def _ce_ls_kernel(labels_ref, logits_ref, out_ref, *, epsilon, num_classes,
                  total_n, block_n):
    """One (block_n, C) logits tile -> one f32 partial loss sum (lane-dense (1,128))."""
    i = pl.program_id(0)

    x = logits_ref[...].astype(jnp.float32)                    # (TN, C) f32 math
    labels = labels_ref[...]                                    # (TN, 1) int32

    # Numerically stable logsumexp along the class (lane) dimension.
    m = jnp.max(x, axis=1, keepdims=True)                       # (TN, 1)
    lse = jnp.log(jnp.sum(jnp.exp(x - m), axis=1, keepdims=True))

    # Fused smoothed-target weighted sum:
    #   sum_c (eps/C + (1-eps)*[c==label]) * x_c
    # (1, C) iota broadcast against (TN, 1) labels -- no (TN, C) iota material.
    cls = jax.lax.broadcasted_iota(jnp.int32, (1, num_classes), 1)
    on_w = jnp.float32(1.0 - epsilon + epsilon / num_classes)
    off_w = jnp.float32(epsilon / num_classes)
    w = jnp.where(labels == cls, on_w, off_w)                    # (TN, C)
    weighted = jnp.sum(w * x, axis=1, keepdims=True)             # (TN, 1)

    row_loss = (m + lse) - weighted                              # (TN, 1)

    # Ragged-tail rows (beyond N): SELECT them out (not multiply), so any
    # garbage / NaN loaded from the out-of-bounds tail never contributes.
    row_ids = i * block_n + jax.lax.broadcasted_iota(jnp.int32, row_loss.shape, 0)
    row_loss = jnp.where(row_ids < total_n, row_loss, 0.0)

    # One f32 partial sum per tile, stored lane-dense (replicated over 128
    # lanes; the host reads lane 0).  Single unmasked-ish store per tile
    # instead of block_n/8 masked column stores.
    partial = jnp.sum(row_loss, axis=0, keepdims=True)           # (1, 1)
    out_ref[...] = jnp.broadcast_to(partial, (1, 128))


def _round_up(v, m):
    return ((v + m - 1) // m) * m


def _vmem_limit_bytes():
    """Scoped-VMEM limit: ~3/4 of physical VMEM, capped at 96 MiB, safe fallback."""
    cap = 64 * 1024 * 1024
    try:
        info = pltpu.get_tpu_info()
        q = getattr(info, "vmem_capacity_bytes", None)
        if isinstance(q, int) and q > 0:
            cap = q
    except Exception:
        pass
    return int(min(cap * 3 // 4, 96 * 1024 * 1024))


def _pick_block_n(n, c, itemsize, align, vmem_limit):
    """Rows/tile so the working set (2x native input tile + ~3x f32 temporaries
    + 2x lane-padded labels tile) stays at ~half the scoped VMEM limit."""
    per_row_bytes = c * (2 * itemsize + 3 * 4) + 2 * 128 * 4
    target = vmem_limit // 2
    bn = max(align, (target // per_row_bytes) // align * align)
    return int(min(bn, 8192))


def cross_entropy_with_label_smoothing(logits, labels, *, epsilon=0.1, block_n=None):
    """logits: (N, C) float (f32 or bf16), labels: (N,) int. Returns scalar f32 mean loss."""
    n, c = logits.shape
    itemsize = jnp.dtype(logits.dtype).itemsize
    align = {4: 8, 2: 16, 1: 32}.get(itemsize, 8)      # keep packed vregs full
    vmem_limit = _vmem_limit_bytes()

    if block_n is None:
        block_n = _pick_block_n(n, c, itemsize, align, vmem_limit)
    block_n = max(align, (int(block_n) // align) * align)
    block_n = min(block_n, _round_up(n, align))         # never bigger than needed

    num_tiles = pl.cdiv(n, block_n)                     # ragged tail masked in-kernel
    labels2d = labels.astype(jnp.int32).reshape(n, 1)

    kernel = functools.partial(
        _ce_ls_kernel,
        epsilon=float(epsilon),
        num_classes=int(c),
        total_n=int(n),
        block_n=int(block_n),
    )

    partials = pl.pallas_call(
        kernel,
        out_shape=jax.ShapeDtypeStruct((1, num_tiles * 128), jnp.float32),
        grid=(num_tiles,),
        in_specs=[
            # Labels tile: (block_n, 1) int32 (lane-padded in VMEM; budgeted for).
            pl.BlockSpec((block_n, 1), lambda i: (i, 0)),
            # Logits tile: the dominant HBM stream (native dtype, unpadded array;
            # the final partial block is handled by Pallas + in-kernel masking).
            pl.BlockSpec((block_n, c), lambda i: (i, 0)),
        ],
        # Lane-dense per-tile partial-sum block.
        out_specs=pl.BlockSpec((1, 128), lambda i: (0, i)),
        compiler_params=pltpu.CompilerParams(
            # Each tile writes its own output block -> fully parallel grid
            # (lets v7x shard the row grid across its 2 TensorCores).
            dimension_semantics=("parallel",),
            vmem_limit_bytes=vmem_limit,
        ),
    )(labels2d, logits)

    # Tiny final reduction: one f32 partial per tile (lane 0 of each block).
    per_tile = partials.reshape(num_tiles, 128)[:, 0]
    return jnp.sum(per_tile) / jnp.float32(n)


def _reference(logits, labels, epsilon=0.1):
    n, c = logits.shape
    one_hot = jax.nn.one_hot(labels, c, dtype=jnp.float32)
    smoothed = (1.0 - epsilon) * one_hot + epsilon / c
    log_probs = jax.nn.log_softmax(logits.astype(jnp.float32), axis=1)
    return (-jnp.sum(smoothed * log_probs, axis=1)).mean()


if __name__ == "__main__":
    key = jax.random.PRNGKey(0)
    k1, k2, k3, k4 = jax.random.split(key, 4)

    # Test 1: small f32 case matching the module's typical usage (N=8, C=32).
    N, C = 8, 32
    logits = jax.random.normal(k1, (N, C), dtype=jnp.float32)
    labels = jax.random.randint(k2, (N,), 0, C, dtype=jnp.int32)
    loss = cross_entropy_with_label_smoothing(logits, labels, epsilon=0.1)
    loss = jax.block_until_ready(loss)
    ref = _reference(logits, labels, epsilon=0.1)
    assert jnp.allclose(loss, ref, atol=1e-5, rtol=1e-5), (loss, ref)

    # Test 2: ragged N (not a multiple of block_n), bf16 logits, multi-tile grid,
    # no host-side padding of the logits stream.
    N2, C2 = 100, 160
    logits2 = jax.random.normal(k3, (N2, C2), dtype=jnp.float32).astype(jnp.bfloat16)
    labels2 = jax.random.randint(k4, (N2,), 0, C2, dtype=jnp.int32)
    loss2 = cross_entropy_with_label_smoothing(logits2, labels2, epsilon=0.1, block_n=16)
    loss2 = jax.block_until_ready(loss2)
    ref2 = _reference(logits2, labels2, epsilon=0.1)
    assert jnp.allclose(loss2, ref2, atol=1e-4, rtol=1e-4), (loss2, ref2)

    print("KERNEL_OK")
</pallas_src>

<mosaic_0001>
module attributes {stable_mosaic.version = 11 : i64} {
  func.func @_ce_ls_kernel(%arg0: i32, %arg1: memref<8x1xi32, #tpu.memory_space<vmem>>, %arg2: memref<8x32xf32, #tpu.memory_space<vmem>>, %arg3: memref<1x128xf32, #tpu.memory_space<vmem>>) attributes {dimension_semantics = [#tpu.dimension_semantics<parallel>], iteration_bounds = array<i64: 1>, scalar_prefetch = 0 : i64, scratch_operands = 0 : i64, tpu.core_type = #tpu.core_type<tc>, window_params = [{transform_indices = @transform_0, window_bounds = array<i64: 8, 1>}, {transform_indices = @transform_1, window_bounds = array<i64: 8, 32>}, {transform_indices = @transform_2, window_bounds = array<i64: 1, 128>}]} {
    %c0 = arith.constant 0 : index
    %c0_0 = arith.constant 0 : index
    %0 = vector.load %arg2[%c0, %c0_0] : memref<8x32xf32, #tpu.memory_space<vmem>>, vector<8x32xf32>
    %c0_1 = arith.constant 0 : index
    %c0_2 = arith.constant 0 : index
    %1 = vector.load %arg1[%c0_1, %c0_2] : memref<8x1xi32, #tpu.memory_space<vmem>>, vector<8x1xi32>
    %cst = arith.constant dense<0xFF800000> : vector<8xf32>
    %2 = vector.multi_reduction <maximumf>, %0, %cst [1] : vector<8x32xf32> to vector<8xf32>
    %3 = vector.shape_cast %2 : vector<8xf32> to vector<8x1xf32>
    %4 = vector.broadcast %3 : vector<8x1xf32> to vector<8x32xf32>
    %5 = arith.subf %0, %4 : vector<8x32xf32>
    %6 = math.exp %5 : vector<8x32xf32>
    %cst_3 = arith.constant dense<0.000000e+00> : vector<8xf32>
    %7 = vector.multi_reduction <add>, %6, %cst_3 [1] : vector<8x32xf32> to vector<8xf32>
    %8 = vector.shape_cast %7 : vector<8xf32> to vector<8x1xf32>
    %9 = math.log %8 : vector<8x1xf32>
    %10 = tpu.iota {dimensions = array<i32: 1>} : vector<1x32xi32>
    %11 = vector.broadcast %1 : vector<8x1xi32> to vector<8x32xi32>
    %12 = vector.broadcast %10 : vector<1x32xi32> to vector<8x32xi32>
    %13 = arith.cmpi eq, %11, %12 : vector<8x32xi32>
    %cst_4 = arith.constant 0.903124988 : f32
    %cst_5 = arith.constant 3.125000e-03 : f32
    %14 = vector.broadcast %cst_4 : f32 to vector<8x32xf32>
    %15 = vector.broadcast %cst_5 : f32 to vector<8x32xf32>
    %16 = arith.select %13, %14, %15 : vector<8x32xi1>, vector<8x32xf32>
    %17 = arith.mulf %16, %0 : vector<8x32xf32>
    %cst_6 = arith.constant dense<0.000000e+00> : vector<8xf32>
    %18 = vector.multi_reduction <add>, %17, %cst_6 [1] : vector<8x32xf32> to vector<8xf32>
    %19 = vector.shape_cast %18 : vector<8xf32> to vector<8x1xf32>
    %20 = arith.addf %3, %9 : vector<8x1xf32>
    %21 = arith.subf %20, %19 : vector<8x1xf32>
    %c8_i32 = arith.constant 8 : i32
    %22 = arith.muli %arg0, %c8_i32 : i32
    %23 = tpu.iota {dimensions = array<i32: 0>} : vector<8x1xi32>
    %24 = vector.broadcast %22 : i32 to vector<8x1xi32>
    %25 = arith.addi %24, %23 : vector<8x1xi32>
    %c8_i32_7 = arith.constant 8 : i32
    %26 = vector.broadcast %c8_i32_7 : i32 to vector<8x1xi32>
    %27 = arith.cmpi slt, %25, %26 : vector<8x1xi32>
    %cst_8 = arith.constant 0.000000e+00 : f32
    %28 = vector.broadcast %cst_8 : f32 to vector<8x1xf32>
    %29 = arith.select %27, %21, %28 : vector<8x1xi1>, vector<8x1xf32>
    %cst_9 = arith.constant dense<0.000000e+00> : vector<1xf32>
    %30 = vector.multi_reduction <add>, %29, %cst_9 [0] : vector<8x1xf32> to vector<1xf32>
    %31 = vector.shape_cast %30 : vector<1xf32> to vector<1x1xf32>
    %32 = vector.shape_cast %31 : vector<1x1xf32> to vector<1x1xf32>
    %33 = vector.broadcast %32 : vector<1x1xf32> to vector<1x128xf32>
    %c0_10 = arith.constant 0 : index
    %c0_11 = arith.constant 0 : index
    %34 = vector.load %arg3[%c0_10, %c0_11] : memref<1x128xf32, #tpu.memory_space<vmem>>, vector<1x128xf32>
    tpu.vector_store %arg3[%c0_10, %c0_11], %33 {strides = array<i32>} : memref<1x128xf32, #tpu.memory_space<vmem>>, vector<1x128xf32>,
    return
  }
  func.func @transform_0(%arg0: i32) -> (i32, i32) {
    %c0_i32 = arith.constant 0 : i32
    %c0_i32_0 = arith.constant 0 : i32
    return %arg0, %c0_i32 : i32, i32
  }
  func.func @transform_1(%arg0: i32) -> (i32, i32) {
    %c0_i32 = arith.constant 0 : i32
    %c0_i32_0 = arith.constant 0 : i32
    return %arg0, %c0_i32 : i32, i32
  }
  func.func @transform_2(%arg0: i32) -> (i32, i32) {
    %c0_i32 = arith.constant 0 : i32
    %c0_i32_0 = arith.constant 0 : i32
    return %c0_i32, %arg0 : i32, i32
  }
}

</mosaic_0001>

<llo_original>
// kernel: tpu_custom_call.1
$region0: #{tpu_custom_call.1}
  #allocation0 [shape = 'u32[]', space=smem, size = 0x4, offset = 0x4, fixed_abs, tag = 'smem constant byte address 0x4 - core index']
  #allocation1 [shape = 'u32[144,128]{1,0:T(1,128)}', space=vmem, size = 0x12000, scoped, tag = 'internal scratch']
  %s0 = inlined_call_operand.vmem [shape: s32[8,1], index: 0, kind: input, shape index: {}]
  %s1 = inlined_call_operand.vmem [shape: f32[8,32], index: 1, kind: input, shape index: {}]
  %s2 = inlined_call_operand.hbm [shape: f32[1,128], index: 2, kind: output, shape index: {}]
  %s3 = sld [smem:[#allocation0]]
  $region18: #{tpu_custom_call.1} parent=0
    _
  %s5 = ssub.s32 1, %s3
  %s6 = scalar_select 0, %s5, %s3
  $region1: #{tpu_custom_call.1} parent=0
    #allocation2 [shape = 'u8[512]{0}', space=vmem, size = 0x400, scoped, tag = 'output window, operand 0, single buffered']
    #allocation3 [shape = 's32[1]{0}', space=sflag, size = 0x4, scoped, tag = 'scoped memory for tpu_custom_call.1']
    %7 = vsyncpa [#allocation3], 0
    // Predicated region
    $region2: #{tpu_custom_call.1} parent=1 // pred_check
      _
    $region3: #{tpu_custom_call.1} parent=1 // pred_check_branch
      %9 = sbr.rel (0) target = $region5
    $region4: #{tpu_custom_call.1} parent=1 // pred_region
      _
    $region5: #{tpu_custom_call.1} parent=1 // pred_fallthru
      _
    // Predicated region
    $region6: #{tpu_custom_call.1} parent=1 // pred_check
      _
    $region7: #{tpu_custom_call.1} parent=1 // pred_check_branch
      %11 = sbr.rel (0) target = $region9
    $region8: #{tpu_custom_call.1} parent=1 // pred_region
      _
    $region9: #{tpu_custom_call.1} parent=1 // pred_fallthru
      _
    %v12 = vld [vmem:[%s1] sm:$0xff]
    %v13 = vld [vmem:[%s0] sm:$0xff]
    %vm14 = vcmask 261120
    %v15 = vsel %vm14, %v12, -inf
    %16 = vmax.xlane.f32.xlu0 %v15
    %v17 = vpop.xlane.xlu0 %16
    %v18 = vsub.f32 %v12, %v17
    %v19 = vmul.f32 %v18, 1.442695
    %v20 = vpow.pop %v19
    %v21 = vsel %vm14, %v20, 0.0
    %22 = vadd.xlane.f32.xlu0 %v21
    %v23 = vpop.xlane.xlu0 %22
    %v24 = vlog2.pop %v23
    %v25 = vmul.f32 %v24, 0.6931472
    %v26 = vlaneseq
    %v27 = vand.u32 %v26, 127
    %28 = vset.pattern.permute.xlu0 0
    %29 = vperm.xlu0 %28, %v13
    %v30 = vpop.permute.xlu0 %29
    %vm31 = vcmp.eq.s32.totalorder %v30, %v27
    %v32 = vsel %vm31, 0.903125, 0.003125
    %v33 = vmul.f32 %v32, %v12
    %v34 = vsel %vm14, %v33, 0.0
    %35 = vadd.xlane.f32.xlu0 %v34
    %v36 = vpop.xlane.xlu0 %35
    %v37 = vadd.f32 %v17, %v25
    %v38 = vsub.f32 %v37, %v36
    %s39 = smul.u32 0, 8
    %v40 = vlaneseq
    %v41 = vshrl.u32 %v40, 7
    %v42 = vstv %s39
    %v43 = vadd.s32 %v42, %v41
    %vm44 = vcmp.lt.s32.totalorder %v43, 8
    %v45 = vsel %vm44, %v38, 0.0
    %v46 = vrot.slane %v45, 4
    %v47 = vadd.f32 %v45, %v46
    %v48 = vrot.slane %v47, 2
    %v49 = vadd.f32 %v47, %v48
    %v50 = vrot.slane %v49, 1
    %v51 = vadd.f32 %v49, %v50
    %52 = vst [vmem:[#allocation2] sm:$0x1] %v51
    // Predicated region
    $region10: #{tpu_custom_call.1} parent=1 // pred_check
      _
    $region11: #{tpu_custom_call.1} parent=1 // pred_check_branch
      %54 = sbr.rel (0) target = $region13
    $region12: #{tpu_custom_call.1} parent=1 // pred_region
      %s56 = ssub.s32 16, 16
      %57 = vsyncadd [#allocation3], %s56
      %s59 = sshll.u32 [#allocation2], 4
      %s60 = int_to_ptr.vmem [resolvable:$true] %s59
      %62 = dma.vmem_to_hbm [thread:$0]  %s60, 16, %s2, [#allocation3]
    $region13: #{tpu_custom_call.1} parent=1 // pred_fallthru
      _
    // Predicated region
    $region14: #{tpu_custom_call.1} parent=1 // pred_check
      _
    $region15: #{tpu_custom_call.1} parent=1 // pred_check_branch
      %64 = sbr.rel (0) target = $region17
    $region16: #{tpu_custom_call.1} parent=1 // pred_region
      %65 = dma.done [#allocation3], 16
    $region17: #{tpu_custom_call.1} parent=1 // pred_fallthru
      _
    %66 = vsyncpa [#allocation3], 1

</llo_original>
